<compile_context>
chip_gen: v7x
topology: tpu7x:2x2x1
jax: 0.10.0
libtpu: 0.0.40
codegen_flags: <defaults>
</compile_context>

<pallas_src>
import functools

import jax
import jax.numpy as jnp
from jax import lax
from jax.experimental import pallas as pl
from jax.experimental.pallas import tpu as pltpu


def _make_pos_embedding(emb_size: int, maxlen: int) -> jnp.ndarray:
    """Deterministic sinusoidal table, identical math to the torch __init__."""
    den = jnp.power(10000.0, jnp.arange(0, emb_size, 2, dtype=jnp.float32) / emb_size)
    pos = jnp.arange(0, maxlen, dtype=jnp.float32).reshape(maxlen, 1)
    angles = pos / den                                   # (maxlen, emb_size//2)
    pe = jnp.zeros((maxlen, emb_size), dtype=jnp.float32)
    pe = pe.at[:, 0::2].set(jnp.sin(angles))
    pe = pe.at[:, 1::2].set(jnp.cos(angles))
    return pe[:, None, :]                                # (maxlen, 1, emb_size)


def _pe_dropout_kernel(seed_ref, x_ref, pe_ref, o_ref, *, dropout_p: float):
    """Add positional encoding (broadcast over batch) + inverted dropout."""
    y = x_ref[...] + pe_ref[...]                         # (ts,B,E) + (ts,1,E), f32

    if dropout_p > 0.0:
        ts, B, E = x_ref.shape
        # Global element index -> counter-based hash (Weyl step + murmur3 fmix).
        # Keyed on the global index so the mask is identical regardless of the
        # tiling and every tile gets distinct random bits.
        s0 = pl.program_id(0) * ts
        s_idx = lax.broadcasted_iota(jnp.int32, (ts, B, E), 0) + s0
        b_idx = lax.broadcasted_iota(jnp.int32, (ts, B, E), 1)
        e_idx = lax.broadcasted_iota(jnp.int32, (ts, B, E), 2)
        ctr = ((s_idx * B + b_idx) * E + e_idx).astype(jnp.uint32)

        seed = seed_ref[0].astype(jnp.uint32)
        h = ctr * jnp.uint32(0x9E3779B9) + seed
        h = h ^ (h >> 16)
        h = h * jnp.uint32(0x85EBCA6B)
        h = h ^ (h >> 13)
        h = h * jnp.uint32(0xC2B2AE35)
        h = h ^ (h >> 16)

        # Integer threshold compare (no float convert / multiply in hot path):
        # keep iff top-31 random bits >= round(p * 2^31).
        thresh31 = min(int(round(dropout_p * (1 << 31))), (1 << 31) - 1)
        r = (h >> 1).astype(jnp.int32)                   # uniform in [0, 2^31)
        keep = r >= jnp.int32(thresh31)

        scale = jnp.float32(1.0 / (1.0 - dropout_p))
        y = jnp.where(keep, y * scale, jnp.zeros_like(y))

    o_ref[...] = y.astype(o_ref.dtype)


def positional_encoding(token_embedding: jnp.ndarray,
                        pos_embedding: jnp.ndarray,
                        *,
                        dropout_p: float,
                        seed: int = 0,
                        tile_s: int | None = None) -> jnp.ndarray:
    """token_embedding: (S, B, E); pos_embedding: (maxlen, 1, E)."""
    S, B, E = token_embedding.shape
    pe_slab = pos_embedding[:S].astype(jnp.float32)      # (S, 1, E) — cheap glue slice
    seed_arr = jnp.asarray([seed], dtype=jnp.int32)

    if tile_s is None:
        # ~2 MiB x-tile: small enough for v7x's 32 MiB scoped VMEM with
        # double-buffered in/out, big enough to amortize per-step overhead.
        per_row_bytes = B * E * token_embedding.dtype.itemsize
        tile_s = max(1, (2 << 20) // max(1, per_row_bytes))
    tile_s = int(min(tile_s, S))
    grid = (pl.cdiv(S, tile_s),)

    kernel = functools.partial(_pe_dropout_kernel, dropout_p=float(dropout_p))
    return pl.pallas_call(
        kernel,
        out_shape=jax.ShapeDtypeStruct((S, B, E), token_embedding.dtype),
        grid=grid,
        in_specs=[
            pl.BlockSpec(memory_space=pltpu.MemorySpace.SMEM),          # seed scalar
            pl.BlockSpec((tile_s, B, E), lambda i: (i, 0, 0)),          # token_embedding
            pl.BlockSpec((tile_s, 1, E), lambda i: (i, 0, 0)),          # PE slab (1/B traffic)
        ],
        out_specs=pl.BlockSpec((tile_s, B, E), lambda i: (i, 0, 0)),
        input_output_aliases={1: 0},   # reuse token_embedding's HBM buffer
        compiler_params=pltpu.CompilerParams(
            dimension_semantics=("parallel",)),
    )(seed_arr, token_embedding, pe_slab)


if __name__ == "__main__":
    # Small but TPU-tile-friendly shapes: last two block dims (B=8, E=128)
    # are exactly one (8,128) vreg tile — full-width (unmasked) vector stores.
    emb_size = 128
    maxlen = 64
    seq_len = 16
    batch = 8
    dropout_p = 0.1

    key = jax.random.PRNGKey(0)
    token_embedding = jax.random.normal(key, (seq_len, batch, emb_size), dtype=jnp.float32)
    pos_embedding = _make_pos_embedding(emb_size, maxlen)

    ref = token_embedding + pos_embedding[:seq_len]

    # Eval-mode path (p=0): must match the reference exactly.  tile_s=8 -> grid of 2.
    out_nodrop = positional_encoding(token_embedding, pos_embedding,
                                     dropout_p=0.0, tile_s=8)
    out_nodrop = jax.block_until_ready(out_nodrop)
    assert out_nodrop.shape == (seq_len, batch, emb_size)
    assert jnp.allclose(out_nodrop, ref, atol=1e-6), "mismatch vs reference (p=0)"

    # Training-mode path: inverted dropout with rate p.
    # TODO(synk): dropout mask cannot bit-match torch's RNG; semantics (inverted
    # dropout with rate p, seed varied per step by the caller) are reproduced.
    out_drop = positional_encoding(token_embedding, pos_embedding,
                                   dropout_p=dropout_p, seed=1234, tile_s=8)
    out_drop = jax.block_until_ready(out_drop)
    assert out_drop.shape == (seq_len, batch, emb_size)

    scale = 1.0 / (1.0 - dropout_p)
    dropped = (out_drop == 0.0)
    kept_ok = jnp.isclose(out_drop, ref * scale, atol=1e-5)
    assert bool(jnp.all(dropped | kept_ok)), "dropout output not in {0, scaled(x+pe)}"
    drop_frac = float(jnp.mean(dropped.astype(jnp.float32)))
    assert 0.02 < drop_frac < 0.30, f"drop fraction {drop_frac} inconsistent with p={dropout_p}"

    print("KERNEL_OK")
</pallas_src>

<mosaic_0001>
module attributes {stable_mosaic.version = 11 : i64} {
  func.func @_pe_dropout_kernel(%arg0: i32, %arg1: memref<1xi32, #tpu.memory_space<smem>>, %arg2: memref<8x8x128xf32, #tpu.memory_space<vmem>>, %arg3: memref<8x1x128xf32, #tpu.memory_space<vmem>>, %arg4: memref<8x8x128xf32, #tpu.memory_space<vmem>>) attributes {dimension_semantics = [#tpu.dimension_semantics<parallel>], iteration_bounds = array<i64: 2>, scalar_prefetch = 0 : i64, scratch_operands = 0 : i64, tpu.core_type = #tpu.core_type<tc>, window_params = [{transform_indices = @transform_0, window_bounds = array<i64: 1>}, {transform_indices = @transform_1, window_bounds = array<i64: 8, 8, 128>}, {transform_indices = @transform_2, window_bounds = array<i64: 8, 1, 128>}, {transform_indices = @transform_3, window_bounds = array<i64: 8, 8, 128>}]} {
    %c0 = arith.constant 0 : index
    %c0_0 = arith.constant 0 : index
    %c0_1 = arith.constant 0 : index
    %0 = vector.load %arg2[%c0, %c0_0, %c0_1] : memref<8x8x128xf32, #tpu.memory_space<vmem>>, vector<8x8x128xf32>
    %c0_2 = arith.constant 0 : index
    %c0_3 = arith.constant 0 : index
    %c0_4 = arith.constant 0 : index
    %1 = vector.load %arg3[%c0_2, %c0_3, %c0_4] : memref<8x1x128xf32, #tpu.memory_space<vmem>>, vector<8x1x128xf32>
    %2 = vector.broadcast %1 : vector<8x1x128xf32> to vector<8x8x128xf32>
    %3 = arith.addf %0, %2 : vector<8x8x128xf32>
    %c0_5 = arith.constant 0 : index
    %c0_6 = arith.constant 0 : index
    %c0_7 = arith.constant 0 : index
    %4 = vector.load %arg4[%c0_5, %c0_6, %c0_7] : memref<8x8x128xf32, #tpu.memory_space<vmem>>, vector<8x8x128xf32>
    tpu.vector_store %arg4[%c0_5, %c0_6, %c0_7], %3 {strides = array<i32>} : memref<8x8x128xf32, #tpu.memory_space<vmem>>, vector<8x8x128xf32>,
    return
  }
  func.func @transform_0(%arg0: i32) -> i32 {
    %c0_i32 = arith.constant 0 : i32
    %c0_i32_0 = arith.constant 0 : i32
    return %c0_i32 : i32
  }
  func.func @transform_1(%arg0: i32) -> (i32, i32, i32) {
    %c0_i32 = arith.constant 0 : i32
    %c0_i32_0 = arith.constant 0 : i32
    %c0_i32_1 = arith.constant 0 : i32
    return %arg0, %c0_i32, %c0_i32_0 : i32, i32, i32
  }
  func.func @transform_2(%arg0: i32) -> (i32, i32, i32) {
    %c0_i32 = arith.constant 0 : i32
    %c0_i32_0 = arith.constant 0 : i32
    %c0_i32_1 = arith.constant 0 : i32
    return %arg0, %c0_i32, %c0_i32_0 : i32, i32, i32
  }
  func.func @transform_3(%arg0: i32) -> (i32, i32, i32) {
    %c0_i32 = arith.constant 0 : i32
    %c0_i32_0 = arith.constant 0 : i32
    %c0_i32_1 = arith.constant 0 : i32
    return %arg0, %c0_i32, %c0_i32_0 : i32, i32, i32
  }
}

</mosaic_0001>

<llo_original>
// kernel: tpu_custom_call.1
$region0: #{tpu_custom_call.1}
  #allocation0 [shape = 'u32[]', space=smem, size = 0x4, offset = 0x4, fixed_abs, tag = 'smem constant byte address 0x4 - core index']
  #allocation1 [shape = 'u32[144,128]{1,0:T(1,128)}', space=vmem, size = 0x12000, scoped, tag = 'internal scratch']
  #allocation2 [shape = 's32[1]{0:T(128)S(6)}', space=smem, size = 0x200, scoped, tag = 'scoped memory for tpu_custom_call.1']
  %s0 = inlined_call_operand.<no memory space> [shape: s32[1], index: 0, kind: input, shape index: {}]
  %s1 = inlined_call_operand.hbm [shape: f32[16,8,128], index: 1, kind: input, shape index: {}, may-alias: {1,3}]
  %s2 = inlined_call_operand.vmem [shape: f32[16,1,128], index: 2, kind: input, shape index: {}]
  %s3 = inlined_call_operand.hbm [shape: f32[16,8,128], index: 3, kind: output, shape index: {}, may-alias: {1,3}]
  %s4 = sld [smem:[#allocation0]]
  $region49: #{tpu_custom_call.1} parent=0
    _
  %s6 = ssub.s32 1, %s4
  %s7 = scalar_select 0, %s6, %s4
  %8 = sst [smem:[#allocation2]] %s0
  $region1: #{tpu_custom_call.1} parent=0
    #allocation3 [shape = 'u8[65536]{0}', space=vmem, size = 0x10000, scoped, tag = 'input window, operand 1']
    #allocation4 [shape = 's32[2]{0}', space=sflag, size = 0x8, scoped, tag = 'scoped memory for tpu_custom_call.1']
    #allocation5 [shape = 's32[2]{0}', space=sflag, size = 0x8, scoped, tag = 'scoped memory for tpu_custom_call.1']
    #allocation6 [shape = 'u8[65536]{0}', space=vmem, size = 0x10000, scoped, tag = 'output window, operand 0']
    %9 = vsyncpa [#allocation4], 0
    %s10 = scalar_lea.sflag [#allocation4], 1
    %11 = vsyncpa %s10, 0
    %12 = vsyncpa [#allocation5], 0
    %s13 = scalar_lea.sflag [#allocation5], 1
    %14 = vsyncpa %s13, 0
    loop: start=0, step=1, limit=4
    $region2: #{tpu_custom_call.1} parent=1 // loop_pre_header
      _
    $region3: #{tpu_custom_call.1} parent=1 // loop_header
      %s16 = sphi 0, %s20
      %p17 = scmp.ge.s32.totalorder %s16, 4
      %s24 = sphi 0, %s24
      %s26 = sphi 0, %s24
      %s27 = sphi 0, %s26
      %s41 = sphi 0, %s27
      %s47 = sphi 0, %s49
      %s50 = sphi 0, %s47
      %s51 = sphi 0, %s50
      %s67 = sphi 0, %s51
      %s73 = sphi 0, %s75
      %s76 = sphi 0, %s73
      %s77 = sphi 0, %s76
      %s93 = sphi 0, %s77
      %s99 = sphi 0, %s101
      %s102 = sphi 0, %s99
      %s103 = sphi 0, %s102
      %s119 = sphi 0, %s103
    $region4: #{tpu_custom_call.1} parent=1 // loop_header_branch
      %19 = sbr.rel (%p17) target = $region8
    $region5: #{tpu_custom_call.1} parent=1 // loop_body
      %s21 = ssub.s32 %s16, 1
      %s22 = ssub.s32 %s16, 2
      %s23 = sadd.s32 %s16, 1
      %s25 = sadd.s32 %s24, 1
      %p28 = scmp.eq.s32.totalorder %s16, 1
      %p29 = scmp.ne.s32.totalorder %s24, %s26
      %p30 = scmp.eq.s32.totalorder %s16, 0
      %p31 = por %p29, %p30
      %p32 = scmp.ne.s32.totalorder %s24, %s26
      %p33 = scmp.eq.s32.totalorder %s21, 1
      %p34 = por %p32, %p33
      %p35 = scmp.ne.s32.totalorder %s26, %s27
      %p36 = scmp.eq.s32.totalorder %s21, 0
      %p37 = por %p35, %p36
      %p38 = scmp.ne.s32.totalorder %s26, %s27
      %p39 = scmp.eq.s32.totalorder %s22, 1
      %p40 = por %p38, %p39
      %p42 = scmp.ne.s32.totalorder %s27, %s41
      %p43 = scmp.eq.s32.totalorder %s22, 0
      %p44 = por %p42, %p43
      %s45 = ssub.s32 %s16, %s23
      %p46 = scmp.eq.s32.totalorder %s45, 0
      %s48 = sadd.s32 %s47, 1
      %s49 = scalar_select %p46, %s47, %s48
      %p52 = pneg %p46
      %p53 = scmp.eq.s32.totalorder %s16, 1
      %p54 = por %p52, %p53
      %p55 = scmp.ne.s32.totalorder %s47, %s50
      %p56 = scmp.eq.s32.totalorder %s16, 0
      %p57 = por %p55, %p56
      %p58 = scmp.ne.s32.totalorder %s47, %s50
      %p59 = scmp.eq.s32.totalorder %s21, 1
      %p60 = por %p58, %p59
      %p61 = scmp.ne.s32.totalorder %s50, %s51
      %p62 = scmp.eq.s32.totalorder %s21, 0
      %p63 = por %p61, %p62
      %p64 = scmp.ne.s32.totalorder %s50, %s51
      %p65 = scmp.eq.s32.totalorder %s22, 1
      %p66 = por %p64, %p65
      %p68 = scmp.ne.s32.totalorder %s51, %s67
      %p69 = scmp.eq.s32.totalorder %s22, 0
      %p70 = por %p68, %p69
      %s71 = ssub.s32 %s16, %s23
      %p72 = scmp.eq.s32.totalorder %s71, 0
      %s74 = sadd.s32 %s73, 1
      %s75 = scalar_select %p72, %s73, %s74
      %p78 = pneg %p72
      %p79 = scmp.eq.s32.totalorder %s16, 1
      %p80 = por %p78, %p79
      %p81 = scmp.ne.s32.totalorder %s73, %s76
      %p82 = scmp.eq.s32.totalorder %s16, 0
      %p83 = por %p81, %p82
      %p84 = scmp.ne.s32.totalorder %s73, %s76
      %p85 = scmp.eq.s32.totalorder %s21, 1
      %p86 = por %p84, %p85
      %p87 = scmp.ne.s32.totalorder %s76, %s77
      %p88 = scmp.eq.s32.totalorder %s21, 0
      %p89 = por %p87, %p88
      %p90 = scmp.ne.s32.totalorder %s76, %s77
      %p91 = scmp.eq.s32.totalorder %s22, 1
      %p92 = por %p90, %p91
      %p94 = scmp.ne.s32.totalorder %s77, %s93
      %p95 = scmp.eq.s32.totalorder %s22, 0
      %p96 = por %p94, %p95
      %s97 = ssub.s32 %s16, %s23
      %p98 = scmp.eq.s32.totalorder %s97, 0
      %s100 = sadd.s32 %s99, 1
      %s101 = scalar_select %p98, %s99, %s100
      %p104 = pneg %p98
      %p105 = scmp.eq.s32.totalorder %s16, 1
      %p106 = por %p104, %p105
      %p107 = scmp.ne.s32.totalorder %s99, %s102
      %p108 = scmp.eq.s32.totalorder %s16, 0
      %p109 = por %p107, %p108
      %p110 = scmp.ne.s32.totalorder %s99, %s102
      %p111 = scmp.eq.s32.totalorder %s21, 1
      %p112 = por %p110, %p111
      %p113 = scmp.ne.s32.totalorder %s102, %s103
      %p114 = scmp.eq.s32.totalorder %s21, 0
      %p115 = por %p113, %p114
      %p116 = scmp.ne.s32.totalorder %s102, %s103
      %p117 = scmp.eq.s32.totalorder %s22, 1
      %p118 = por %p116, %p117
      %p120 = scmp.ne.s32.totalorder %s103, %s119
      %p121 = scmp.eq.s32.totalorder %s22, 0
      %p122 = por %p120, %p121
      %p123 = scmp.le.s32.totalorder 1, %s16
      %p124 = scmp.lt.s32.totalorder %s16, 3
      %p125 = pnand %p123, %p124
      %p126 = pneg %p125
      // Predicated region
      $region9: #{tpu_custom_call.1} parent=5 // pred_check
        _
      $region10: #{tpu_custom_call.1} parent=5 // pred_check_branch
        %128 = sbr.rel (%p125) target = $region12
      $region11: #{tpu_custom_call.1} parent=5 // pred_region
        %s129 = ssub.s32 %s16, 1
        // Predicated region
        $region13: #{tpu_custom_call.1} parent=11 // pred_check
          %p130 = pneg %p37
        $region14: #{tpu_custom_call.1} parent=11 // pred_check_branch
          %132 = sbr.rel (%p130) target = $region16
        $region15: #{tpu_custom_call.1} parent=11 // pred_region
          _
        $region16: #{tpu_custom_call.1} parent=11 // pred_fallthru
          _
      $region12: #{tpu_custom_call.1} parent=5 // pred_fallthru
        _
      %p133 = scmp.lt.s32.totalorder %s16, 2
      // Predicated region
      $region17: #{tpu_custom_call.1} parent=5 // pred_check
        %p134 = pneg %p133
      $region18: #{tpu_custom_call.1} parent=5 // pred_check_branch
        %136 = sbr.rel (%p134) target = $region20
      $region19: #{tpu_custom_call.1} parent=5 // pred_region
        // Predicated region
        $region21: #{tpu_custom_call.1} parent=19 // pred_check
          %p137 = pneg %p57
        $region22: #{tpu_custom_call.1} parent=19 // pred_check_branch
          %139 = sbr.rel (%p137) target = $region24
        $region23: #{tpu_custom_call.1} parent=19 // pred_region
          %s140 = sand.u32 %s47, 1
          %s141 = scalar_lea.sflag [#allocation4], %s140
          %s142 = sand.u32 %s47, 1
          %s143 = smul.addr %s142, 64
          %s144 = scalar_lea.vmem [#allocation3], %s143
          %s145 = smul.u32 8, %s16
          %s147 = ssub.s32 1024, 1024
          %148 = vsyncadd %s141, %s147
          %s149 = smul.addr %s145, 128
          %s150 = scalar_lea.hbm %s1, %s149
          %s151 = sshll.u32 %s144, 4
          %s152 = int_to_ptr.vmem [resolvable:$true] %s151
          %157 = dma.hbm_to_vmem [thread:$0]  %s150, 1024, %s152, %s141, 128, 128, 8
        $region24: #{tpu_custom_call.1} parent=19 // pred_fallthru
          _
        // Predicated region
        $region25: #{tpu_custom_call.1} parent=19 // pred_check
          %p158 = pneg %p83
        $region26: #{tpu_custom_call.1} parent=19 // pred_check_branch
          %160 = sbr.rel (%p158) target = $region28
        $region27: #{tpu_custom_call.1} parent=19 // pred_region
          %s161 = smul.u32 8, %s16
          %p162 = scmp.lt.s32.totalorder %s161, 15
          %s163 = scalar_select %p162, %s161, 15
          %s164 = scalar_lea.vmem %s2, %s163
          %s165 = smul.u32 8, %s16
        $region28: #{tpu_custom_call.1} parent=19 // pred_fallthru
          _
      $region20: #{tpu_custom_call.1} parent=5 // pred_fallthru
        _
      %p166 = scmp.le.s32.totalorder 1, %s16
      %p167 = scmp.lt.s32.totalorder %s16, 3
      %p168 = pnand %p166, %p167
      %p169 = pneg %p168
      // Predicated region
      $region29: #{tpu_custom_call.1} parent=5 // pred_check
        _
      $region30: #{tpu_custom_call.1} parent=5 // pred_check_branch
        %171 = sbr.rel (%p168) target = $region32
      $region31: #{tpu_custom_call.1} parent=5 // pred_region
        %s172 = ssub.s32 %s16, 1
        %s173 = sand.u32 %s50, 1
        %s174 = scalar_lea.sflag [#allocation4], %s173
        %s175 = sand.u32 %s50, 1
        %s176 = smul.addr %s175, 64
        %s177 = scalar_lea.vmem [#allocation3], %s176
        // Predicated region
        $region33: #{tpu_custom_call.1} parent=31 // pred_check
          %p178 = pneg %p63
        $region34: #{tpu_custom_call.1} parent=31 // pred_check_branch
          %180 = sbr.rel (%p178) target = $region36
        $region35: #{tpu_custom_call.1} parent=31 // pred_region
          %181 = dma.done %s174, 1024
        $region36: #{tpu_custom_call.1} parent=31 // pred_fallthru
          _
        %p182 = pneg %p37
        %p183 = pneg %p34
        %s184 = sand.u32 %s50, 1
        %s185 = scalar_lea.sflag [#allocation4], %s184
        %s186 = sand.u32 %s50, 1
        %s187 = smul.addr %s186, 64
        %s188 = scalar_lea.vmem [#allocation3], %s187
        %p189 = pneg %p63
        %p190 = pneg %p60
        %s191 = smul.u32 8, %s21
        %p192 = scmp.lt.s32.totalorder %s191, 15
        %s193 = scalar_select %p192, %s191, 15
        %s194 = scalar_lea.vmem %s2, %s193
        %p195 = pneg %p89
        %p196 = pneg %p86
        %p197 = pneg %p115
        %p198 = pneg %p112
        %s199 = sand.u32 %s102, 1
        %s200 = scalar_lea.sflag [#allocation5], %s199
        %s201 = sand.u32 %s102, 1
        %s202 = smul.addr %s201, 64
        %s203 = scalar_lea.vmem [#allocation6], %s202
        %s204 = smul.u32 8, %s21
        %s205 = smul.u32 8, %s21
        %p206 = scmp.lt.s32.totalorder %s205, 15
        %s207 = scalar_select %p206, %s205, 15
        %s208 = scalar_lea.vmem %s2, %s207
        %s209 = smul.u32 8, %s21
        %s210 = smul.u32 8, %s21
        %v211 = vld [vmem:[%s177] sm:$0xff]
        %v212 = vld [vmem:[%s177 + $0x8] sm:$0xff]
        %v213 = vld [vmem:[%s177 + $0x10] sm:$0xff]
        %v214 = vld [vmem:[%s177 + $0x18] sm:$0xff]
        %v215 = vld [vmem:[%s177 + $0x20] sm:$0xff]
        %v216 = vld [vmem:[%s177 + $0x28] sm:$0xff]
        %v217 = vld [vmem:[%s177 + $0x30] sm:$0xff]
        %v218 = vld [vmem:[%s177 + $0x38] sm:$0xff]
        %v219 = vld [vmem:[%s208] sm:$0x1]
        %v220 = vld [vmem:[%s208 + $0x1] sm:$0x1]
        %v221 = vld [vmem:[%s208 + $0x2] sm:$0x1]
        %v222 = vld [vmem:[%s208 + $0x3] sm:$0x1]
        %v223 = vld [vmem:[%s208 + $0x4] sm:$0x1]
        %v224 = vld [vmem:[%s208 + $0x5] sm:$0x1]
        %v225 = vld [vmem:[%s208 + $0x6] sm:$0x1]
        %v226 = vld [vmem:[%s208 + $0x7] sm:$0x1]
        %v235 = vlaneseq
        %v236 = vshrl.u32 %v235, 7
        %v237 = vsub.s32 0, %v236
        %v238 = vrot.slane %v219, %v237
        %v239 = vlaneseq
        %v240 = vshrl.u32 %v239, 7
        %v241 = vsub.s32 0, %v240
        %v242 = vrot.slane %v220, %v241
        %v243 = vlaneseq
        %v244 = vshrl.u32 %v243, 7
        %v245 = vsub.s32 0, %v244
        %v246 = vrot.slane %v221, %v245
        %v247 = vlaneseq
        %v248 = vshrl.u32 %v247, 7
        %v249 = vsub.s32 0, %v248
        %v250 = vrot.slane %v222, %v249
        %v251 = vlaneseq
        %v252 = vshrl.u32 %v251, 7
        %v253 = vsub.s32 0, %v252
        %v254 = vrot.slane %v223, %v253
        %v255 = vlaneseq
        %v256 = vshrl.u32 %v255, 7
        %v257 = vsub.s32 0, %v256
        %v258 = vrot.slane %v224, %v257
        %v259 = vlaneseq
        %v260 = vshrl.u32 %v259, 7
        %v261 = vsub.s32 0, %v260
        %v262 = vrot.slane %v225, %v261
        %v263 = vlaneseq
        %v264 = vshrl.u32 %v263, 7
        %v265 = vsub.s32 0, %v264
        %v266 = vrot.slane %v226, %v265
        %v275 = vadd.f32 %v211, %v238
        %v276 = vadd.f32 %v212, %v242
        %v277 = vadd.f32 %v213, %v246
        %v278 = vadd.f32 %v214, %v250
        %v279 = vadd.f32 %v215, %v254
        %v280 = vadd.f32 %v216, %v258
        %v281 = vadd.f32 %v217, %v262
        %v282 = vadd.f32 %v218, %v266
        %283 = vst [vmem:[%s203] sm:$0xff] %v275
        %284 = vst [vmem:[%s203 + $0x8] sm:$0xff] %v276
        %285 = vst [vmem:[%s203 + $0x10] sm:$0xff] %v277
        %286 = vst [vmem:[%s203 + $0x18] sm:$0xff] %v278
        %287 = vst [vmem:[%s203 + $0x20] sm:$0xff] %v279
        %288 = vst [vmem:[%s203 + $0x28] sm:$0xff] %v280
        %289 = vst [vmem:[%s203 + $0x30] sm:$0xff] %v281
        %290 = vst [vmem:[%s203 + $0x38] sm:$0xff] %v282
        %s291 = sand.u32 %s102, 1
        %s292 = scalar_lea.sflag [#allocation5], %s291
        %s293 = sand.u32 %s102, 1
        %s294 = smul.addr %s293, 64
        %s295 = scalar_lea.vmem [#allocation6], %s294
        // Predicated region
        $region37: #{tpu_custom_call.1} parent=31 // pred_check
          %p296 = pneg %p112
        $region38: #{tpu_custom_call.1} parent=31 // pred_check_branch
          %298 = sbr.rel (%p296) target = $region40
        $region39: #{tpu_custom_call.1} parent=31 // pred_region
          %s299 = smul.u32 8, %s21
          %s301 = ssub.s32 1024, 1024
          %302 = vsyncadd %s292, %s301
          %s303 = smul.addr %s299, 128
          %s304 = scalar_lea.hbm %s3, %s303
          %s305 = sshll.u32 %s295, 4
          %s306 = int_to_ptr.vmem [resolvable:$true] %s305
          %311 = dma.vmem_to_hbm [thread:$0]  %s306, 1024, %s304, %s292, 128, 128, 8
        $region40: #{tpu_custom_call.1} parent=31 // pred_fallthru
          _
      $region32: #{tpu_custom_call.1} parent=5 // pred_fallthru
        _
      %p312 = scmp.le.s32.totalorder 2, %s16
      // Predicated region
      $region41: #{tpu_custom_call.1} parent=5 // pred_check
        %p313 = pneg %p312
      $region42: #{tpu_custom_call.1} parent=5 // pred_check_branch
        %315 = sbr.rel (%p313) target = $region44
      $region43: #{tpu_custom_call.1} parent=5 // pred_region
        %s316 = ssub.s32 %s16, 2
        // Predicated region
        $region45: #{tpu_custom_call.1} parent=43 // pred_check
          %p317 = pneg %p118
        $region46: #{tpu_custom_call.1} parent=43 // pred_check_branch
          %319 = sbr.rel (%p317) target = $region48
        $region47: #{tpu_custom_call.1} parent=43 // pred_region
          %s320 = sand.u32 %s103, 1
          %s321 = scalar_lea.sflag [#allocation5], %s320
          %s322 = sand.u32 %s103, 1
          %s323 = smul.addr %s322, 64
          %s324 = scalar_lea.vmem [#allocation6], %s323
          %325 = dma.done %s321, 1024
        $region48: #{tpu_custom_call.1} parent=43 // pred_fallthru
          _
      $region44: #{tpu_custom_call.1} parent=5 // pred_fallthru
        _
    $region6: #{tpu_custom_call.1} parent=1 // loop_footer
      %s20 = sadd.s32 1, %s16
    $region7: #{tpu_custom_call.1} parent=1 // loop_footer_branch
      %15 = sbr.rel target = $region3
    $region8: #{tpu_custom_call.1} parent=1 // loop_exit
      _
    %326 = vsyncpa [#allocation4], 1
    %s327 = scalar_lea.sflag [#allocation4], 1
    %328 = vsyncpa %s327, 1
    %329 = vsyncpa [#allocation5], 1
    %s330 = scalar_lea.sflag [#allocation5], 1
    %331 = vsyncpa %s330, 1

</llo_original>
